<compile_context>
chip_gen: v7x
topology: tpu7x:2x2x1
jax: 0.10.0
libtpu: 0.0.40
codegen_flags: <defaults>
</compile_context>

<pallas_src>
import math

import jax
import jax.numpy as jnp
from jax.experimental import pallas as pl
from jax.experimental.pallas import tpu as pltpu


def _round_up(x, m):
    return ((x + m - 1) // m) * m


def _cdiv(a, b):
    return -(-a // b)


# ----------------------------------------------------------------------------
# Fused Pallas kernel: all layers of MarkerEncoder in one pass.
# ----------------------------------------------------------------------------
def _make_kernel(num_layers, hp, compute_dtype):
    L, HP, cdt = num_layers, hp, compute_dtype

    def kernel(*refs):
        # refs layout: x, off_0..off_{L-1}, w_x, w_off_0..w_off_{L-1},
        #              [w_rest if L>1], b_all, out
        x_ref = refs[0]
        off_refs = refs[1:1 + L]
        wx_ref = refs[1 + L]
        wo_refs = refs[2 + L:2 + 2 * L]
        pos = 2 + 2 * L
        if L > 1:
            wrest_ref = refs[pos]
            pos += 1
        b_ref = refs[pos]
        o_ref = refs[pos + 1]

        b = b_ref[...]                                          # (2L, HP) f32

        # ---- Layer 0 (dense + residual pre-activation fully folded) --------
        # zx/z0 are (BT, 2*HP): cols [0:HP] -> y0 contribution,
        #                       cols [HP:2HP] -> h0 pre-activation contribution
        zx = jnp.dot(x_ref[...].astype(cdt), wx_ref[...],
                     preferred_element_type=jnp.float32)
        z0 = jnp.dot(off_refs[0][...].astype(cdt), wo_refs[0][...],
                     preferred_element_type=jnp.float32)
        y = zx[:, :HP] + z0[:, :HP] + b[0:1, :]
        h = zx[:, HP:] + z0[:, HP:] + b[1:2, :]
        h = jnp.maximum(h, 0.2 * h)                             # LeakyReLU(0.2)
        out = y + h

        # ---- Layers 1..L-1 --------------------------------------------------
        for i in range(1, L):
            zi = jnp.dot(off_refs[i][...].astype(cdt), wo_refs[i][...],
                         preferred_element_type=jnp.float32)    # (BT, HP)
            wd = wrest_ref[:, 2 * (i - 1) * HP:(2 * i - 1) * HP]
            wr = wrest_ref[:, (2 * i - 1) * HP:2 * i * HP]
            y = (jnp.dot(out.astype(cdt), wd, preferred_element_type=jnp.float32)
                 + zi + b[2 * i:2 * i + 1, :])
            h = (jnp.dot(y.astype(cdt), wr, preferred_element_type=jnp.float32)
                 + b[2 * i + 1:2 * i + 2, :])
            h = jnp.maximum(h, 0.2 * h)
            out = y + h

        o_ref[...] = out.astype(o_ref.dtype)

    return kernel


# ----------------------------------------------------------------------------
# Parameter initialization (PyTorch nn.Linear-style uniform, deterministic)
# ----------------------------------------------------------------------------
def _init_linear(key, fan_in, fan_out):
    kw, kb = jax.random.split(key)
    bound = 1.0 / math.sqrt(fan_in)
    # Stored already transposed: (fan_in, fan_out) so kernel does x @ W.
    w = jax.random.uniform(kw, (fan_in, fan_out), jnp.float32, -bound, bound)
    b = jax.random.uniform(kb, (1, fan_out), jnp.float32, -bound, bound)
    return w, b


def init_marker_encoder_params(key, input_size, hidden_size, offset_dims,
                               num_layers=2):
    params = []
    for i in range(num_layers):
        key, k_dense, k_off, k_res = jax.random.split(key, 4)
        in_dim = input_size if i == 0 else hidden_size
        wd, bd = _init_linear(k_dense, in_dim, hidden_size)        # DenseBlock.dense
        wo, bo = _init_linear(k_off, offset_dims[i], hidden_size)  # DenseBlock.offset_enc
        wr, br = _init_linear(k_res, hidden_size, hidden_size)     # ResidualBlock.linear
        params.append((wd, bd, wo, bo, wr, br))
    return params


# ----------------------------------------------------------------------------
# Pack per-layer parameters into a few contiguous, lane-dense buffers.
#   * Layer-0 residual matmul is folded: W_x / W_off0 get a second HP-wide
#     column block containing Wd0@Wr0 / 0.01*Wo0@Wr0; biases composed too.
#   * Offset weights carry the 1/100 scale.
#   * Matmul weights stored in `weight_dtype` (default bf16); biases stay f32.
# ----------------------------------------------------------------------------
def pack_marker_encoder_params(params, input_size, hidden_size, offset_dims,
                               weight_dtype=jnp.bfloat16):
    L = len(params)
    H = hidden_size
    HP = _round_up(H, 128)

    wd0, bd0, wo0, bo0, wr0, br0 = params[0]
    d0 = offset_dims[0]

    w_x = jnp.zeros((input_size, 2 * HP), jnp.float32)
    w_x = w_x.at[:, :H].set(wd0)
    w_x = w_x.at[:, HP:HP + H].set(wd0 @ wr0)

    w_o0 = jnp.zeros((d0, 2 * HP), jnp.float32)
    w_o0 = w_o0.at[:, :H].set(0.01 * wo0)
    w_o0 = w_o0.at[:, HP:HP + H].set(0.01 * (wo0 @ wr0))

    b_all = jnp.zeros((2 * L, HP), jnp.float32)
    c0 = bd0[0] + 0.01 * bo0[0]                      # fused layer-0 dense bias
    b_all = b_all.at[0, :H].set(c0)
    b_all = b_all.at[1, :H].set(c0 @ wr0 + br0[0])   # folded residual bias

    w_offs = [w_o0]
    w_rest = jnp.zeros((HP, 2 * (L - 1) * HP), jnp.float32) if L > 1 else None

    for i in range(1, L):
        wd, bd, wo, bo, wr, br = params[i]
        di = offset_dims[i]
        woi = jnp.zeros((di, HP), jnp.float32).at[:, :H].set(0.01 * wo)
        w_offs.append(woi)
        w_rest = w_rest.at[:H, 2 * (i - 1) * HP:2 * (i - 1) * HP + H].set(wd)
        w_rest = w_rest.at[:H, (2 * i - 1) * HP:(2 * i - 1) * HP + H].set(wr)
        b_all = b_all.at[2 * i, :H].set(bd[0] + 0.01 * bo[0])
        b_all = b_all.at[2 * i + 1, :H].set(br[0])

    return {
        "w_x": w_x.astype(weight_dtype),
        "w_offs": [w.astype(weight_dtype) for w in w_offs],
        "w_rest": w_rest.astype(weight_dtype) if w_rest is not None else None,
        "b_all": b_all,                       # f32
        "HP": HP, "H": H, "L": L,
        "compute_dtype": weight_dtype,
    }


# ----------------------------------------------------------------------------
# MarkerEncoder forward (skeleton_info='concat') — single fused pallas_call
# ----------------------------------------------------------------------------
def marker_encoder_forward(x, offsets, packed, bt_target=1024):
    HP, H, L = packed["HP"], packed["H"], packed["L"]
    cdt = packed["compute_dtype"]
    assert len(offsets) == L

    B = x.shape[0]
    xf = x.reshape(B, -1).astype(jnp.float32)
    offs = [o.reshape(B, -1).astype(jnp.float32) for o in offsets]

    # Batch tiling: tiles are multiples of 8 sublanes, evened out across the
    # grid, capped at bt_target rows; use >=2 grid steps whenever the batch
    # has >=2 sublane groups so both TensorCores are used on v7x.
    B8 = _round_up(B, 8)
    n_steps = max(_cdiv(B8, bt_target), 2 if B8 >= 16 else 1)
    BT = _round_up(_cdiv(B8, n_steps), 8)
    BP = BT * n_steps

    if BP != B:
        pad = BP - B
        xf = jnp.pad(xf, ((0, pad), (0, 0)))
        offs = [jnp.pad(o, ((0, pad), (0, 0))) for o in offs]

    act_inputs = [xf] + offs
    weight_inputs = [packed["w_x"]] + list(packed["w_offs"])
    if L > 1:
        weight_inputs.append(packed["w_rest"])
    weight_inputs.append(packed["b_all"])

    in_specs = (
        [pl.BlockSpec((BT, a.shape[1]), lambda i: (i, 0)) for a in act_inputs]
        + [pl.BlockSpec(w.shape, lambda i: (0, 0)) for w in weight_inputs]
    )

    # Explicit VMEM budget (double-buffered activations/output, resident
    # weights counted twice to be conservative).  Note v7x has only 64 MiB
    # physical VMEM per TensorCore — re-derive before scaling H or L.
    itemsize = lambda a: jnp.dtype(a.dtype).itemsize
    act_bytes = sum(BT * a.shape[1] * itemsize(a) for a in act_inputs)
    out_bytes = BT * HP * 4
    w_bytes = sum(a.size * itemsize(a) for a in weight_inputs)
    vmem_needed = 2 * (act_bytes + out_bytes) + 2 * w_bytes + (4 << 20)
    vmem_limit = int(min(max(vmem_needed, 32 << 20), 96 << 20))

    kernel = _make_kernel(L, HP, cdt)
    out = pl.pallas_call(
        kernel,
        out_shape=jax.ShapeDtypeStruct((BP, HP), jnp.float32),
        grid_spec=pltpu.PrefetchScalarGridSpec(
            num_scalar_prefetch=0,
            grid=(n_steps,),
            in_specs=in_specs,
            out_specs=pl.BlockSpec((BT, HP), lambda i: (i, 0)),
        ),
        compiler_params=pltpu.CompilerParams(
            dimension_semantics=("parallel",),
            vmem_limit_bytes=vmem_limit),
    )(*act_inputs, *weight_inputs)

    return out[:B, :H]


# ----------------------------------------------------------------------------
# Pure-JAX reference (un-fused, un-packed f32 math) for a sanity check
# ----------------------------------------------------------------------------
def _reference_forward(x, offsets, params):
    B = x.shape[0]
    out = x.reshape(B, -1).astype(jnp.float32)
    for i, (wd, bd, wo, bo, wr, br) in enumerate(params):
        off = offsets[i].reshape(B, -1).astype(jnp.float32)
        y = out @ wd + bd + (off @ wo + bo) * 0.01
        h = y @ wr + br
        h = jnp.where(h >= 0, h, 0.2 * h)
        out = y + h
    return out


# TODO(synk): change_param_states (requires_grad toggling) is a training-time
# flag with no inference-kernel equivalent.

if __name__ == "__main__":
    key = jax.random.PRNGKey(0)
    k_x, k_o0, k_o1, k_params = jax.random.split(key, 4)

    # Small shapes: batch=2, 8 markers x 3 coords -> input_size=24,
    # hidden=32, num_layers=2, per-layer offset dim = 16.
    B = 2
    num_markers, coord = 8, 3
    input_size = num_markers * coord
    hidden_size = 32
    offset_dims = [16, 16]

    x = jax.random.normal(k_x, (B, num_markers, coord), jnp.float32)
    offsets = [
        jax.random.normal(k_o0, (B, offset_dims[0]), jnp.float32),
        jax.random.normal(k_o1, (B, offset_dims[1]), jnp.float32),
    ]

    params = init_marker_encoder_params(
        k_params, input_size, hidden_size, offset_dims, num_layers=2)
    ref = _reference_forward(x, offsets, params)

    # 1) Exact path (f32 weights): validates the layer-0 fold / packing math.
    packed_f32 = pack_marker_encoder_params(
        params, input_size, hidden_size, offset_dims, weight_dtype=jnp.float32)
    out_f32 = jax.block_until_ready(marker_encoder_forward(x, offsets, packed_f32))
    assert out_f32.shape == (B, hidden_size)
    assert jnp.allclose(out_f32, ref, atol=1e-4, rtol=1e-4)

    # 2) Fast path (bf16 MXU operands, f32 accumulation / element-wise math).
    packed_bf16 = pack_marker_encoder_params(
        params, input_size, hidden_size, offset_dims, weight_dtype=jnp.bfloat16)
    out_bf16 = jax.block_until_ready(marker_encoder_forward(x, offsets, packed_bf16))
    assert out_bf16.shape == (B, hidden_size)
    assert jnp.allclose(out_bf16, ref, atol=5e-2, rtol=5e-2)

    print("KERNEL_OK")
</pallas_src>

<mosaic_0001>
module attributes {stable_mosaic.version = 11 : i64} {
  func.func @kernel(%arg0: i32, %arg1: memref<8x24xf32, #tpu.memory_space<vmem>>, %arg2: memref<8x16xf32, #tpu.memory_space<vmem>>, %arg3: memref<8x16xf32, #tpu.memory_space<vmem>>, %arg4: memref<24x256xf32, #tpu.memory_space<vmem>>, %arg5: memref<16x256xf32, #tpu.memory_space<vmem>>, %arg6: memref<16x128xf32, #tpu.memory_space<vmem>>, %arg7: memref<128x256xf32, #tpu.memory_space<vmem>>, %arg8: memref<4x128xf32, #tpu.memory_space<vmem>>, %arg9: memref<8x128xf32, #tpu.memory_space<vmem>>) attributes {dimension_semantics = [#tpu.dimension_semantics<parallel>], iteration_bounds = array<i64: 1>, scalar_prefetch = 0 : i64, scratch_operands = 0 : i64, tpu.core_type = #tpu.core_type<tc>, window_params = [{transform_indices = @transform_0, window_bounds = array<i64: 8, 24>}, {transform_indices = @transform_1, window_bounds = array<i64: 8, 16>}, {transform_indices = @transform_2, window_bounds = array<i64: 8, 16>}, {pipeline_mode = #tpu.pipeline_mode<synchronous>, transform_indices = @transform_3, window_bounds = array<i64: 24, 256>}, {pipeline_mode = #tpu.pipeline_mode<synchronous>, transform_indices = @transform_4, window_bounds = array<i64: 16, 256>}, {pipeline_mode = #tpu.pipeline_mode<synchronous>, transform_indices = @transform_5, window_bounds = array<i64: 16, 128>}, {pipeline_mode = #tpu.pipeline_mode<synchronous>, transform_indices = @transform_6, window_bounds = array<i64: 128, 256>}, {pipeline_mode = #tpu.pipeline_mode<synchronous>, transform_indices = @transform_7, window_bounds = array<i64: 4, 128>}, {transform_indices = @transform_8, window_bounds = array<i64: 8, 128>}]} {
    %c0 = arith.constant 0 : index
    %c0_0 = arith.constant 0 : index
    %0 = vector.load %arg8[%c0, %c0_0] : memref<4x128xf32, #tpu.memory_space<vmem>>, vector<4x128xf32>
    %c0_1 = arith.constant 0 : index
    %c0_2 = arith.constant 0 : index
    %1 = vector.load %arg1[%c0_1, %c0_2] : memref<8x24xf32, #tpu.memory_space<vmem>>, vector<8x24xf32>
    %c0_3 = arith.constant 0 : index
    %c0_4 = arith.constant 0 : index
    %2 = vector.load %arg4[%c0_3, %c0_4] : memref<24x256xf32, #tpu.memory_space<vmem>>, vector<24x256xf32>
    %cst = arith.constant dense<0.000000e+00> : vector<8x256xf32>
    %3 = tpu.matmul %1, %2, %cst {dimension_numbers = #tpu.dot_dimension_numbers<[1], [0], [0], [1], [0, 0, 1, 1], [], []>} : vector<8x24xf32>, vector<24x256xf32>, vector<8x256xf32> -> vector<8x256xf32>
    %c0_5 = arith.constant 0 : index
    %c0_6 = arith.constant 0 : index
    %4 = vector.load %arg2[%c0_5, %c0_6] : memref<8x16xf32, #tpu.memory_space<vmem>>, vector<8x16xf32>
    %c0_7 = arith.constant 0 : index
    %c0_8 = arith.constant 0 : index
    %5 = vector.load %arg5[%c0_7, %c0_8] : memref<16x256xf32, #tpu.memory_space<vmem>>, vector<16x256xf32>
    %cst_9 = arith.constant dense<0.000000e+00> : vector<8x256xf32>
    %6 = tpu.matmul %4, %5, %cst_9 {dimension_numbers = #tpu.dot_dimension_numbers<[1], [0], [0], [1], [0, 0, 1, 1], [], []>} : vector<8x16xf32>, vector<16x256xf32>, vector<8x256xf32> -> vector<8x256xf32>
    %7 = vector.extract_strided_slice %3 {offsets = [0, 0], sizes = [8, 128], strides = [1, 1]} : vector<8x256xf32> to vector<8x128xf32>
    %8 = vector.extract_strided_slice %6 {offsets = [0, 0], sizes = [8, 128], strides = [1, 1]} : vector<8x256xf32> to vector<8x128xf32>
    %9 = arith.addf %7, %8 : vector<8x128xf32>
    %10 = vector.extract_strided_slice %0 {offsets = [0, 0], sizes = [1, 128], strides = [1, 1]} : vector<4x128xf32> to vector<1x128xf32>
    %11 = vector.broadcast %10 : vector<1x128xf32> to vector<8x128xf32>
    %12 = arith.addf %9, %11 : vector<8x128xf32>
    %13 = vector.extract_strided_slice %3 {offsets = [0, 128], sizes = [8, 128], strides = [1, 1]} : vector<8x256xf32> to vector<8x128xf32>
    %14 = vector.extract_strided_slice %6 {offsets = [0, 128], sizes = [8, 128], strides = [1, 1]} : vector<8x256xf32> to vector<8x128xf32>
    %15 = arith.addf %13, %14 : vector<8x128xf32>
    %16 = vector.extract_strided_slice %0 {offsets = [1, 0], sizes = [1, 128], strides = [1, 1]} : vector<4x128xf32> to vector<1x128xf32>
    %17 = vector.broadcast %16 : vector<1x128xf32> to vector<8x128xf32>
    %18 = arith.addf %15, %17 : vector<8x128xf32>
    %cst_10 = arith.constant 2.000000e-01 : f32
    %19 = vector.broadcast %cst_10 : f32 to vector<8x128xf32>
    %20 = arith.mulf %19, %18 : vector<8x128xf32>
    %21 = arith.maximumf %18, %20 : vector<8x128xf32>
    %22 = arith.addf %12, %21 : vector<8x128xf32>
    %c0_11 = arith.constant 0 : index
    %c0_12 = arith.constant 0 : index
    %23 = vector.load %arg3[%c0_11, %c0_12] : memref<8x16xf32, #tpu.memory_space<vmem>>, vector<8x16xf32>
    %c0_13 = arith.constant 0 : index
    %c0_14 = arith.constant 0 : index
    %24 = vector.load %arg6[%c0_13, %c0_14] : memref<16x128xf32, #tpu.memory_space<vmem>>, vector<16x128xf32>
    %cst_15 = arith.constant dense<0.000000e+00> : vector<8x128xf32>
    %25 = tpu.matmul %23, %24, %cst_15 {dimension_numbers = #tpu.dot_dimension_numbers<[1], [0], [0], [1], [0, 0, 1, 1], [], []>} : vector<8x16xf32>, vector<16x128xf32>, vector<8x128xf32> -> vector<8x128xf32>
    %c0_16 = arith.constant 0 : index
    %c0_17 = arith.constant 0 : index
    %26 = vector.load %arg7[%c0_16, %c0_17] : memref<128x256xf32, #tpu.memory_space<vmem>>, vector<128x128xf32>
    %c0_18 = arith.constant 0 : index
    %c128 = arith.constant 128 : index
    %27 = vector.load %arg7[%c0_18, %c128] : memref<128x256xf32, #tpu.memory_space<vmem>>, vector<128x128xf32>
    %cst_19 = arith.constant dense<0.000000e+00> : vector<8x128xf32>
    %28 = tpu.matmul %22, %26, %cst_19 {dimension_numbers = #tpu.dot_dimension_numbers<[1], [0], [0], [1], [0, 0, 1, 1], [], []>} : vector<8x128xf32>, vector<128x128xf32>, vector<8x128xf32> -> vector<8x128xf32>
    %29 = arith.addf %28, %25 : vector<8x128xf32>
    %30 = vector.extract_strided_slice %0 {offsets = [2, 0], sizes = [1, 128], strides = [1, 1]} : vector<4x128xf32> to vector<1x128xf32>
    %31 = vector.broadcast %30 : vector<1x128xf32> to vector<8x128xf32>
    %32 = arith.addf %29, %31 : vector<8x128xf32>
    %cst_20 = arith.constant dense<0.000000e+00> : vector<8x128xf32>
    %33 = tpu.matmul %32, %27, %cst_20 {dimension_numbers = #tpu.dot_dimension_numbers<[1], [0], [0], [1], [0, 0, 1, 1], [], []>} : vector<8x128xf32>, vector<128x128xf32>, vector<8x128xf32> -> vector<8x128xf32>
    %34 = vector.extract_strided_slice %0 {offsets = [3, 0], sizes = [1, 128], strides = [1, 1]} : vector<4x128xf32> to vector<1x128xf32>
    %35 = vector.broadcast %34 : vector<1x128xf32> to vector<8x128xf32>
    %36 = arith.addf %33, %35 : vector<8x128xf32>
    %cst_21 = arith.constant 2.000000e-01 : f32
    %37 = vector.broadcast %cst_21 : f32 to vector<8x128xf32>
    %38 = arith.mulf %37, %36 : vector<8x128xf32>
    %39 = arith.maximumf %36, %38 : vector<8x128xf32>
    %40 = arith.addf %32, %39 : vector<8x128xf32>
    %c0_22 = arith.constant 0 : index
    %c0_23 = arith.constant 0 : index
    %41 = vector.load %arg9[%c0_22, %c0_23] : memref<8x128xf32, #tpu.memory_space<vmem>>, vector<8x128xf32>
    tpu.vector_store %arg9[%c0_22, %c0_23], %40 {strides = array<i32>} : memref<8x128xf32, #tpu.memory_space<vmem>>, vector<8x128xf32>,
    return
  }
  func.func @transform_0(%arg0: i32) -> (i32, i32) {
    %c0_i32 = arith.constant 0 : i32
    %c0_i32_0 = arith.constant 0 : i32
    return %arg0, %c0_i32 : i32, i32
  }
  func.func @transform_1(%arg0: i32) -> (i32, i32) {
    %c0_i32 = arith.constant 0 : i32
    %c0_i32_0 = arith.constant 0 : i32
    return %arg0, %c0_i32 : i32, i32
  }
  func.func @transform_2(%arg0: i32) -> (i32, i32) {
    %c0_i32 = arith.constant 0 : i32
    %c0_i32_0 = arith.constant 0 : i32
    return %arg0, %c0_i32 : i32, i32
  }
  func.func @transform_3(%arg0: i32) -> (i32, i32) {
    %c0_i32 = arith.constant 0 : i32
    %c0_i32_0 = arith.constant 0 : i32
    %c0_i32_1 = arith.constant 0 : i32
    return %c0_i32, %c0_i32_0 : i32, i32
  }
  func.func @transform_4(%arg0: i32) -> (i32, i32) {
    %c0_i32 = arith.constant 0 : i32
    %c0_i32_0 = arith.constant 0 : i32
    %c0_i32_1 = arith.constant 0 : i32
    return %c0_i32, %c0_i32_0 : i32, i32
  }
  func.func @transform_5(%arg0: i32) -> (i32, i32) {
    %c0_i32 = arith.constant 0 : i32
    %c0_i32_0 = arith.constant 0 : i32
    %c0_i32_1 = arith.constant 0 : i32
    return %c0_i32, %c0_i32_0 : i32, i32
  }
  func.func @transform_6(%arg0: i32) -> (i32, i32) {
    %c0_i32 = arith.constant 0 : i32
    %c0_i32_0 = arith.constant 0 : i32
    %c0_i32_1 = arith.constant 0 : i32
    return %c0_i32, %c0_i32_0 : i32, i32
  }
  func.func @transform_7(%arg0: i32) -> (i32, i32) {
    %c0_i32 = arith.constant 0 : i32
    %c0_i32_0 = arith.constant 0 : i32
    %c0_i32_1 = arith.constant 0 : i32
    return %c0_i32, %c0_i32_0 : i32, i32
  }
  func.func @transform_8(%arg0: i32) -> (i32, i32) {
    %c0_i32 = arith.constant 0 : i32
    %c0_i32_0 = arith.constant 0 : i32
    return %arg0, %c0_i32 : i32, i32
  }
}

</mosaic_0001>

<llo_original>
// kernel: tpu_custom_call.1
$region0: #{tpu_custom_call.1}
  #allocation0 [shape = 'u32[]', space=smem, size = 0x4, offset = 0x4, fixed_abs, tag = 'smem constant byte address 0x4 - core index']
  #allocation1 [shape = 'u32[144,128]{1,0:T(1,128)}', space=vmem, size = 0x12000, scoped, tag = 'internal scratch']
  %s0 = inlined_call_operand.hbm [shape: f32[8,24], index: 0, kind: input, shape index: {}]
  %s1 = inlined_call_operand.hbm [shape: f32[8,16], index: 1, kind: input, shape index: {}]
  %s2 = inlined_call_operand.hbm [shape: f32[8,16], index: 2, kind: input, shape index: {}]
  %s3 = inlined_call_operand.hbm [shape: f32[24,256], index: 3, kind: input, shape index: {}]
  %s4 = inlined_call_operand.hbm [shape: f32[16,256], index: 4, kind: input, shape index: {}]
  %s5 = inlined_call_operand.vmem [shape: f32[16,128], index: 5, kind: input, shape index: {}]
  %s6 = inlined_call_operand.hbm [shape: f32[128,256], index: 6, kind: input, shape index: {}]
  %s7 = inlined_call_operand.vmem [shape: f32[4,128], index: 7, kind: input, shape index: {}]
  %s8 = inlined_call_operand.hbm [shape: f32[8,128], index: 8, kind: output, shape index: {}]
  %s9 = sld [smem:[#allocation0]]
  $region66: #{tpu_custom_call.1} parent=0
    _
  %s11 = ssub.s32 1, %s9
  %s12 = scalar_select 0, %s11, %s9
  $region1: #{tpu_custom_call.1} parent=0
    #allocation2 [shape = 'u8[4096]{0}', space=vmem, size = 0x1000, scoped, tag = 'input window, operand 0, single buffered']
    #allocation3 [shape = 's32[1]{0}', space=sflag, size = 0x4, scoped, tag = 'scoped memory for tpu_custom_call.1']
    #allocation4 [shape = 's32[1]{0}', space=sflag, size = 0x4, scoped, tag = 'scoped memory for tpu_custom_call.1']
    #allocation5 [shape = 'u8[4096]{0}', space=vmem, size = 0x1000, scoped, tag = 'input window, operand 1, single buffered']
    #allocation6 [shape = 's32[1]{0}', space=sflag, size = 0x4, scoped, tag = 'scoped memory for tpu_custom_call.1']
    #allocation7 [shape = 'u8[4096]{0}', space=vmem, size = 0x1000, scoped, tag = 'input window, operand 2, single buffered']
    #allocation8 [shape = 'u8[24576]{0}', space=vmem, size = 0x6000, scoped, tag = 'input window, operand 3, single buffered']
    #allocation9 [shape = 's32[1]{0}', space=sflag, size = 0x4, scoped, tag = 'scoped memory for tpu_custom_call.1']
    #allocation10 [shape = 'u8[16384]{0}', space=vmem, size = 0x4000, scoped, tag = 'input window, operand 4, single buffered']
    #allocation11 [shape = 'u8[131072]{0}', space=vmem, size = 0x20000, scoped, tag = 'input window, operand 6, single buffered']
    #allocation12 [shape = 's32[1]{0}', space=sflag, size = 0x4, scoped, tag = 'scoped memory for tpu_custom_call.1']
    #allocation13 [shape = 'u8[4096]{0}', space=vmem, size = 0x1000, scoped, tag = 'output window, operand 0, single buffered']
    %13 = vsyncpa [#allocation3], 0
    %14 = vsyncpa [#allocation6], 0
    %15 = vsyncpa [#allocation9], 0
    %16 = vsyncpa [#allocation12], 0
    %17 = vsyncpa [#allocation4], 0
    // Predicated region
    $region2: #{tpu_custom_call.1} parent=1 // pred_check
      _
    $region3: #{tpu_custom_call.1} parent=1 // pred_check_branch
      %19 = sbr.rel (0) target = $region5
    $region4: #{tpu_custom_call.1} parent=1 // pred_region
      %s21 = ssub.s32 128, 128
      %22 = vsyncadd [#allocation3], %s21
      %s24 = sshll.u32 [#allocation2], 4
      %s25 = int_to_ptr.vmem [resolvable:$true] %s24
      %27 = dma.hbm_to_vmem [thread:$0]  %s0, 128, %s25, [#allocation3]
    $region5: #{tpu_custom_call.1} parent=1 // pred_fallthru
      _
    // Predicated region
    $region6: #{tpu_custom_call.1} parent=1 // pred_check
      _
    $region7: #{tpu_custom_call.1} parent=1 // pred_check_branch
      %29 = sbr.rel (0) target = $region9
    $region8: #{tpu_custom_call.1} parent=1 // pred_region
      %s31 = ssub.s32 128, 128
      %32 = vsyncadd [#allocation6], %s31
      %s34 = sshll.u32 [#allocation5], 4
      %s35 = int_to_ptr.vmem [resolvable:$true] %s34
      %37 = dma.hbm_to_vmem [thread:$0]  %s1, 128, %s35, [#allocation6]
    $region9: #{tpu_custom_call.1} parent=1 // pred_fallthru
      _
    // Predicated region
    $region10: #{tpu_custom_call.1} parent=1 // pred_check
      _
    $region11: #{tpu_custom_call.1} parent=1 // pred_check_branch
      %39 = sbr.rel (0) target = $region13
    $region12: #{tpu_custom_call.1} parent=1 // pred_region
      %s41 = ssub.s32 128, 128
      %42 = vsyncadd [#allocation6], %s41
      %s44 = sshll.u32 [#allocation7], 4
      %s45 = int_to_ptr.vmem [resolvable:$true] %s44
      %47 = dma.hbm_to_vmem [thread:$0]  %s2, 128, %s45, [#allocation6]
    $region13: #{tpu_custom_call.1} parent=1 // pred_fallthru
      _
    // Predicated region
    $region14: #{tpu_custom_call.1} parent=1 // pred_check
      _
    $region15: #{tpu_custom_call.1} parent=1 // pred_check_branch
      %49 = sbr.rel (0) target = $region17
    $region16: #{tpu_custom_call.1} parent=1 // pred_region
      %s51 = ssub.s32 768, 768
      %52 = vsyncadd [#allocation9], %s51
      %s53 = sshll.u32 [#allocation8], 4
      %s54 = int_to_ptr.vmem [resolvable:$true] %s53
      %59 = dma.hbm_to_vmem [thread:$0]  %s3, 768, %s54, [#allocation9], 256, 256, 16
    $region17: #{tpu_custom_call.1} parent=1 // pred_fallthru
      _
    // Predicated region
    $region18: #{tpu_custom_call.1} parent=1 // pred_check
      _
    $region19: #{tpu_custom_call.1} parent=1 // pred_check_branch
      %61 = sbr.rel (0) target = $region21
    $region20: #{tpu_custom_call.1} parent=1 // pred_region
      %s63 = ssub.s32 512, 512
      %64 = vsyncadd [#allocation9], %s63
      %s65 = sshll.u32 [#allocation10], 4
      %s66 = int_to_ptr.vmem [resolvable:$true] %s65
      %71 = dma.hbm_to_vmem [thread:$0]  %s4, 512, %s66, [#allocation9], 256, 256, 16
    $region21: #{tpu_custom_call.1} parent=1 // pred_fallthru
      _
    // Predicated region
    $region22: #{tpu_custom_call.1} parent=1 // pred_check
      _
    $region23: #{tpu_custom_call.1} parent=1 // pred_check_branch
      %73 = sbr.rel (0) target = $region25
    $region24: #{tpu_custom_call.1} parent=1 // pred_region
      _
    $region25: #{tpu_custom_call.1} parent=1 // pred_fallthru
      _
    // Predicated region
    $region26: #{tpu_custom_call.1} parent=1 // pred_check
      _
    $region27: #{tpu_custom_call.1} parent=1 // pred_check_branch
      %75 = sbr.rel (0) target = $region29
    $region28: #{tpu_custom_call.1} parent=1 // pred_region
      %s77 = ssub.s32 4096, 4096
      %78 = vsyncadd [#allocation12], %s77
      %s79 = sshll.u32 [#allocation11], 4
      %s80 = int_to_ptr.vmem [resolvable:$true] %s79
      %85 = dma.hbm_to_vmem [thread:$0]  %s6, 4096, %s80, [#allocation12], 256, 256, 16
    $region29: #{tpu_custom_call.1} parent=1 // pred_fallthru
      _
    // Predicated region
    $region30: #{tpu_custom_call.1} parent=1 // pred_check
      _
    $region31: #{tpu_custom_call.1} parent=1 // pred_check_branch
      %87 = sbr.rel (0) target = $region33
    $region32: #{tpu_custom_call.1} parent=1 // pred_region
      _
    $region33: #{tpu_custom_call.1} parent=1 // pred_fallthru
      _
    // Predicated region
    $region34: #{tpu_custom_call.1} parent=1 // pred_check
      _
    $region35: #{tpu_custom_call.1} parent=1 // pred_check_branch
      %89 = sbr.rel (0) target = $region37
    $region36: #{tpu_custom_call.1} parent=1 // pred_region
      %90 = dma.done [#allocation3], 128
    $region37: #{tpu_custom_call.1} parent=1 // pred_fallthru
      _
    // Predicated region
    $region38: #{tpu_custom_call.1} parent=1 // pred_check
      _
    $region39: #{tpu_custom_call.1} parent=1 // pred_check_branch
      %92 = sbr.rel (0) target = $region41
    $region40: #{tpu_custom_call.1} parent=1 // pred_region
      %93 = dma.done [#allocation6], 128
    $region41: #{tpu_custom_call.1} parent=1 // pred_fallthru
      _
    // Predicated region
    $region42: #{tpu_custom_call.1} parent=1 // pred_check
      _
    $region43: #{tpu_custom_call.1} parent=1 // pred_check_branch
      %95 = sbr.rel (0) target = $region45
    $region44: #{tpu_custom_call.1} parent=1 // pred_region
      %96 = dma.done [#allocation6], 128
    $region45: #{tpu_custom_call.1} parent=1 // pred_fallthru
      _
    // Predicated region
    $region46: #{tpu_custom_call.1} parent=1 // pred_check
      _
    $region47: #{tpu_custom_call.1} parent=1 // pred_check_branch
      %98 = sbr.rel (0) target = $region49
    $region48: #{tpu_custom_call.1} parent=1 // pred_region
      %99 = dma.done [#allocation9], 768
    $region49: #{tpu_custom_call.1} parent=1 // pred_fallthru
      _
    // Predicated region
    $region50: #{tpu_custom_call.1} parent=1 // pred_check
      _
    $region51: #{tpu_custom_call.1} parent=1 // pred_check_branch
      %101 = sbr.rel (0) target = $region53
    $region52: #{tpu_custom_call.1} parent=1 // pred_region
      %102 = dma.done [#allocation9], 512
    $region53: #{tpu_custom_call.1} parent=1 // pred_fallthru
      _
    // Predicated region
    $region54: #{tpu_custom_call.1} parent=1 // pred_check
      _
    $region55: #{tpu_custom_call.1} parent=1 // pred_check_branch
      %104 = sbr.rel (0) target = $region57
    $region56: #{tpu_custom_call.1} parent=1 // pred_region
      %105 = dma.done [#allocation12], 4096
    $region57: #{tpu_custom_call.1} parent=1 // pred_fallthru
      _
    %v106 = vld [vmem:[%s7] sm:$0xf]
    %v107 = vld [vmem:[#allocation2] sm:$0xff]
    %v108 = vld [vmem:[#allocation8] sm:$0xff]
    %v109 = vld [vmem:[#allocation8 + $0x8] sm:$0xff]
    %v110 = vld [vmem:[#allocation8 + $0x10] sm:$0xff]
    %v111 = vld [vmem:[#allocation8 + $0x18] sm:$0xff]
    %v112 = vld [vmem:[#allocation8 + $0x20] sm:$0xff]
    %v113 = vld [vmem:[#allocation8 + $0x28] sm:$0xff]
    %vm114 = vcmask 195584
    %v116 = vsel %vm114, %v107, 0
    %118 = vmatprep.subr.mxu0 %v109
    %119 = vmatpush1.msra.mxu0 %v108
    %120 = vmatprep.subr.mxu0 %v111
    %121 = vmatpush1.msra.mxu0 %v110
    %122 = vmatprep.subr.mxu0 %v113
    %123 = vmatpush1.msra.mxu0 %v112
    %124 = vmatprep.subr.mxu0 0.0
    %125 = vmatpush1.msra.mxu0 0.0
    %126 = vmatprep.subr.mxu0 0.0
    %127 = vmatpush1.msra.mxu0 0.0
    %128 = vmatprep.subr.mxu0 0.0
    %129 = vmatpush1.msra.mxu0 0.0
    %130 = vmatprep.subr.mxu0 0.0
    %131 = vmatpush1.msra.mxu0 0.0
    %132 = vmatprep.subr.mxu0 0.0
    %133 = vmatpush1.msra.mxu0 0.0
    %134 = vmatprep.subr.mxu0 0.0
    %135 = vmatpush1.msra.mxu0 0.0
    %136 = vmatprep.subr.mxu0 0.0
    %137 = vmatpush1.msra.mxu0 0.0
    %138 = vmatprep.subr.mxu0 0.0
    %139 = vmatpush1.msra.mxu0 0.0
    %140 = vmatprep.subr.mxu0 0.0
    %141 = vmatpush1.msra.mxu0 0.0
    %142 = vmatprep.subr.mxu0 0.0
    %143 = vmatpush1.msra.mxu0 0.0
    %144 = vmatprep.subr.mxu0 0.0
    %145 = vmatpush1.msra.mxu0 0.0
    %146 = vmatprep.subr.mxu0 0.0
    %147 = vmatpush1.msra.mxu0 0.0
    %148 = vmatprep.subr.mxu0 0.0
    %149 = vmatpush1.msra.mxu0 0.0
    %150 = vmatprep.subr.mxu0 0.0
    %151 = vmatpush1.msra.mxu0 0.0
    %152 = vmatprep.subr.mxu0 0.0
    %153 = vmatpush1.msra.mxu0 0.0
    %154 = vmatprep.subr.mxu0 0.0
    %155 = vmatpush1.msra.mxu0 0.0
    %156 = vmatprep.subr.mxu0 0.0
    %157 = vmatpush1.msra.mxu0 0.0
    %158 = vmatprep.subr.mxu0 0.0
    %159 = vmatpush1.msra.mxu0 0.0
    %160 = vmatprep.subr.mxu0 0.0
    %161 = vmatpush1.msra.mxu0 0.0
    %162 = vmatprep.subr.mxu0 0.0
    %163 = vmatpush1.msra.mxu0 0.0
    %164 = vmatprep.subr.mxu0 0.0
    %165 = vmatpush1.msra.mxu0 0.0
    %166 = vmatprep.subr.mxu0 0.0
    %167 = vmatpush1.msra.mxu0 0.0
    %168 = vmatprep.subr.mxu0 0.0
    %169 = vmatpush1.msra.mxu0 0.0
    %170 = vmatprep.subr.mxu0 0.0
    %171 = vmatpush1.msra.mxu0 0.0
    %172 = vmatprep.subr.mxu0 0.0
    %173 = vmatpush1.msra.mxu0 0.0
    %174 = vmatprep.subr.mxu0 0.0
    %175 = vmatpush1.msra.mxu0 0.0
    %176 = vmatprep.subr.mxu0 0.0
    %177 = vmatpush1.msra.mxu0 0.0
    %178 = vmatprep.subr.mxu0 0.0
    %179 = vmatpush1.msra.mxu0 0.0
    %180 = vmatprep.subr.mxu0 0.0
    %181 = vmatpush1.msra.mxu0 0.0
    %182 = vmatprep.mubr.f32.mxu0 0.0
    %183 = vmatmul.mubr.f32.gmra.mrb[0].mxu0 %v116
    %v184 = vpop.f32.mrb[0].mxu0
    %v185 = vadd.f32 0.0, %v184
    %v186 = vpop.f32.mrb[0].mxu0
    %v187 = vadd.f32 0.0, %v186
    %188 = vdwg.mxu0
    %v189 = vld [vmem:[#allocation5] sm:$0xff]
    %v190 = vld [vmem:[#allocation10] sm:$0xff]
    %v191 = vld [vmem:[#allocation10 + $0x8] sm:$0xff]
    %v192 = vld [vmem:[#allocation10 + $0x10] sm:$0xff]
    %v193 = vld [vmem:[#allocation10 + $0x18] sm:$0xff]
    %vm194 = vcmask 130048
    %v196 = vsel %vm194, %v189, 0
    %198 = vmatprep.subr.mxu0 %v191
    %199 = vmatpush1.msra.mxu0 %v190
    %200 = vmatprep.subr.mxu0 %v193
    %201 = vmatpush1.msra.mxu0 %v192
    %202 = vmatprep.subr.mxu0 0.0
    %203 = vmatpush1.msra.mxu0 0.0
    %204 = vmatprep.subr.mxu0 0.0
    %205 = vmatpush1.msra.mxu0 0.0
    %206 = vmatprep.subr.mxu0 0.0
    %207 = vmatpush1.msra.mxu0 0.0
    %208 = vmatprep.subr.mxu0 0.0
    %209 = vmatpush1.msra.mxu0 0.0
    %210 = vmatprep.subr.mxu0 0.0
    %211 = vmatpush1.msra.mxu0 0.0
    %212 = vmatprep.subr.mxu0 0.0
    %213 = vmatpush1.msra.mxu0 0.0
    %214 = vmatprep.subr.mxu0 0.0
    %215 = vmatpush1.msra.mxu0 0.0
    %216 = vmatprep.subr.mxu0 0.0
    %217 = vmatpush1.msra.mxu0 0.0
    %218 = vmatprep.subr.mxu0 0.0
    %219 = vmatpush1.msra.mxu0 0.0
    %220 = vmatprep.subr.mxu0 0.0
    %221 = vmatpush1.msra.mxu0 0.0
    %222 = vmatprep.subr.mxu0 0.0
    %223 = vmatpush1.msra.mxu0 0.0
    %224 = vmatprep.subr.mxu0 0.0
    %225 = vmatpush1.msra.mxu0 0.0
    %226 = vmatprep.subr.mxu0 0.0
    %227 = vmatpush1.msra.mxu0 0.0
    %228 = vmatprep.subr.mxu0 0.0
    %229 = vmatpush1.msra.mxu0 0.0
    %230 = vmatprep.subr.mxu0 0.0
    %231 = vmatpush1.msra.mxu0 0.0
    %232 = vmatprep.subr.mxu0 0.0
    %233 = vmatpush1.msra.mxu0 0.0
    %234 = vmatprep.subr.mxu0 0.0
    %235 = vmatpush1.msra.mxu0 0.0
    %236 = vmatprep.subr.mxu0 0.0
    %237 = vmatpush1.msra.mxu0 0.0
    %238 = vmatprep.subr.mxu0 0.0
    %239 = vmatpush1.msra.mxu0 0.0
    %240 = vmatprep.subr.mxu0 0.0
    %241 = vmatpush1.msra.mxu0 0.0
    %242 = vmatprep.subr.mxu0 0.0
    %243 = vmatpush1.msra.mxu0 0.0
    %244 = vmatprep.subr.mxu0 0.0
    %245 = vmatpush1.msra.mxu0 0.0
    %246 = vmatprep.subr.mxu0 0.0
    %247 = vmatpush1.msra.mxu0 0.0
    %248 = vmatprep.subr.mxu0 0.0
    %249 = vmatpush1.msra.mxu0 0.0
    %250 = vmatprep.subr.mxu0 0.0
    %251 = vmatpush1.msra.mxu0 0.0
    %252 = vmatprep.subr.mxu0 0.0
    %253 = vmatpush1.msra.mxu0 0.0
    %254 = vmatprep.subr.mxu0 0.0
    %255 = vmatpush1.msra.mxu0 0.0
    %256 = vmatprep.subr.mxu0 0.0
    %257 = vmatpush1.msra.mxu0 0.0
    %258 = vmatprep.subr.mxu0 0.0
    %259 = vmatpush1.msra.mxu0 0.0
    %260 = vmatprep.subr.mxu0 0.0
    %261 = vmatpush1.msra.mxu0 0.0
    %262 = vmatprep.mubr.f32.mxu0 0.0
    %263 = vmatmul.mubr.f32.gmra.mrb[0].mxu0 %v196
    %v264 = vpop.f32.mrb[0].mxu0
    %v265 = vadd.f32 0.0, %v264
    %v266 = vpop.f32.mrb[0].mxu0
    %v267 = vadd.f32 0.0, %v266
    %268 = vdwg.mxu0
    %v269 = vadd.f32 %v185, %v265
    %v270 = vlaneseq
    %v271 = vshrl.u32 %v270, 7
    %v272 = vsub.s32 0, %v271
    %v273 = vrot.slane %v106, %v272
    %v274 = vadd.f32 %v269, %v273
    %v275 = vadd.f32 %v187, %v267
    %v276 = vlaneseq
    %v277 = vshrl.u32 %v276, 7
    %v278 = vsub.s32 1, %v277
    %v279 = vrot.slane %v106, %v278
    %v280 = vadd.f32 %v275, %v279
    %v281 = vmul.f32 %v280, 0.2
    %v282 = vmax.f32 %v280, %v281
    %v283 = vadd.f32 %v274, %v282
    %v284 = vld [vmem:[#allocation7] sm:$0xff]
    %v285 = vld [vmem:[%s5] sm:$0xff]
    %v286 = vld [vmem:[%s5 + $0x8] sm:$0xff]
    %v288 = vsel %vm194, %v284, 0
    %290 = vmatprep.subr.mxu0 0.0
    %291 = vmatpush1.msra.mxu0 %v285
    %292 = vmatprep.subr.mxu0 0.0
    %293 = vmatpush1.msra.mxu0 %v286
    %294 = vmatprep.subr.mxu0 0.0
    %295 = vmatpush1.msra.mxu0 0.0
    %296 = vmatprep.subr.mxu0 0.0
    %297 = vmatpush1.msra.mxu0 0.0
    %298 = vmatprep.subr.mxu0 0.0
    %299 = vmatpush1.msra.mxu0 0.0
    %300 = vmatprep.subr.mxu0 0.0
    %301 = vmatpush1.msra.mxu0 0.0
    %302 = vmatprep.subr.mxu0 0.0
    %303 = vmatpush1.msra.mxu0 0.0
    %304 = vmatprep.subr.mxu0 0.0
    %305 = vmatpush1.msra.mxu0 0.0
    %306 = vmatprep.subr.mxu0 0.0
    %307 = vmatpush1.msra.mxu0 0.0
    %308 = vmatprep.subr.mxu0 0.0
    %309 = vmatpush1.msra.mxu0 0.0
    %310 = vmatprep.subr.mxu0 0.0
    %311 = vmatpush1.msra.mxu0 0.0
    %312 = vmatprep.subr.mxu0 0.0
    %313 = vmatpush1.msra.mxu0 0.0
    %314 = vmatprep.subr.mxu0 0.0
    %315 = vmatpush1.msra.mxu0 0.0
    %316 = vmatprep.subr.mxu0 0.0
    %317 = vmatpush1.msra.mxu0 0.0
    %318 = vmatprep.subr.mxu0 0.0
    %319 = vmatpush1.msra.mxu0 0.0
    %320 = vmatprep.subr.mxu0 0.0
    %321 = vmatpush1.msra.mxu0 0.0
    %322 = vmatprep.subr.mxu0 0.0
    %323 = vmatpush1.msra.mxu0 0.0
    %324 = vmatprep.subr.mxu0 0.0
    %325 = vmatpush1.msra.mxu0 0.0
    %326 = vmatprep.subr.mxu0 0.0
    %327 = vmatpush1.msra.mxu0 0.0
    %328 = vmatprep.subr.mxu0 0.0
    %329 = vmatpush1.msra.mxu0 0.0
    %330 = vmatprep.subr.mxu0 0.0
    %331 = vmatpush1.msra.mxu0 0.0
    %332 = vmatprep.subr.mxu0 0.0
    %333 = vmatpush1.msra.mxu0 0.0
    %334 = vmatprep.subr.mxu0 0.0
    %335 = vmatpush1.msra.mxu0 0.0
    %336 = vmatprep.subr.mxu0 0.0
    %337 = vmatpush1.msra.mxu0 0.0
    %338 = vmatprep.subr.mxu0 0.0
    %339 = vmatpush1.msra.mxu0 0.0
    %340 = vmatprep.subr.mxu0 0.0
    %341 = vmatpush1.msra.mxu0 0.0
    %342 = vmatprep.subr.mxu0 0.0
    %343 = vmatpush1.msra.mxu0 0.0
    %344 = vmatprep.subr.mxu0 0.0
    %345 = vmatpush1.msra.mxu0 0.0
    %346 = vmatprep.subr.mxu0 0.0
    %347 = vmatpush1.msra.mxu0 0.0
    %348 = vmatprep.subr.mxu0 0.0
    %349 = vmatpush1.msra.mxu0 0.0
    %350 = vmatprep.subr.mxu0 0.0
    %351 = vmatpush1.msra.mxu0 0.0
    %352 = vmatprep.subr.mxu0 0.0
    %353 = vmatpush1.msra.mxu0 0.0
    %354 = vmatprep.mubr.f32.mxu0 0.0
    %355 = vmatmul.mubr.f32.gmra.mrb[0].mxu0 %v288
    %v356 = vpop.f32.mrb[0].mxu0
    %v357 = vadd.f32 0.0, %v356
    %v358 = vpop.f32.mrb[0].mxu0
    %359 = vdwg.mxu0
    %v360 = vld [vmem:[#allocation11] sm:$0xff]
    %v361 = vld [vmem:[#allocation11 + $0x10] sm:$0xff]
    %v362 = vld [vmem:[#allocation11 + $0x20] sm:$0xff]
    %v363 = vld [vmem:[#allocation11 + $0x30] sm:$0xff]
    %v364 = vld [vmem:[#allocation11 + $0x40] sm:$0xff]
    %v365 = vld [vmem:[#allocation11 + $0x50] sm:$0xff]
    %v366 = vld [vmem:[#allocation11 + $0x60] sm:$0xff]
    %v367 = vld [vmem:[#allocation11 + $0x70] sm:$0xff]
    %v368 = vld [vmem:[#allocation11 + $0x80] sm:$0xff]
    %v369 = vld [vmem:[#allocation11 + $0x90] sm:$0xff]
    %v370 = vld [vmem:[#allocation11 + $0xa0] sm:$0xff]
    %v371 = vld [vmem:[#allocation11 + $0xb0] sm:$0xff]
    %v372 = vld [vmem:[#allocation11 + $0xc0] sm:$0xff]
    %v373 = vld [vmem:[#allocation11 + $0xd0] sm:$0xff]
    %v374 = vld [vmem:[#allocation11 + $0xe0] sm:$0xff]
    %v375 = vld [vmem:[#allocation11 + $0xf0] sm:$0xff]
    %v376 = vld [vmem:[#allocation11 + $0x8] sm:$0xff]
    %v377 = vld [vmem:[#allocation11 + $0x18] sm:$0xff]
    %v378 = vld [vmem:[#allocation11 + $0x28] sm:$0xff]
    %v379 = vld [vmem:[#allocation11 + $0x38] sm:$0xff]
    %v380 = vld [vmem:[#allocation11 + $0x48] sm:$0xff]
    %v381 = vld [vmem:[#allocation11 + $0x58] sm:$0xff]
    %v382 = vld [vmem:[#allocation11 + $0x68] sm:$0xff]
    %v383 = vld [vmem:[#allocation11 + $0x78] sm:$0xff]
    %v384 = vld [vmem:[#allocation11 + $0x88] sm:$0xff]
    %v385 = vld [vmem:[#allocation11 + $0x98] sm:$0xff]
    %v386 = vld [vmem:[#allocation11 + $0xa8] sm:$0xff]
    %v387 = vld [vmem:[#allocation11 + $0xb8] sm:$0xff]
    %v388 = vld [vmem:[#allocation11 + $0xc8] sm:$0xff]
    %v389 = vld [vmem:[#allocation11 + $0xd8] sm:$0xff]
    %v390 = vld [vmem:[#allocation11 + $0xe8] sm:$0xff]
    %v391 = vld [vmem:[#allocation11 + $0xf8] sm:$0xff]
    %392 = vmatprep.subr.mxu0 0.0
    %393 = vmatpush1.msra.mxu0 %v360
    %394 = vmatprep.subr.mxu0 0.0
    %395 = vmatpush1.msra.mxu0 %v361
    %396 = vmatprep.subr.mxu0 0.0
    %397 = vmatpush1.msra.mxu0 %v362
    %398 = vmatprep.subr.mxu0 0.0
    %399 = vmatpush1.msra.mxu0 %v363
    %400 = vmatprep.subr.mxu0 0.0
    %401 = vmatpush1.msra.mxu0 %v364
    %402 = vmatprep.subr.mxu0 0.0
    %403 = vmatpush1.msra.mxu0 %v365
    %404 = vmatprep.subr.mxu0 0.0
    %405 = vmatpush1.msra.mxu0 %v366
    %406 = vmatprep.subr.mxu0 0.0
    %407 = vmatpush1.msra.mxu0 %v367
    %408 = vmatprep.subr.mxu0 0.0
    %409 = vmatpush1.msra.mxu0 %v368
    %410 = vmatprep.subr.mxu0 0.0
    %411 = vmatpush1.msra.mxu0 %v369
    %412 = vmatprep.subr.mxu0 0.0
    %413 = vmatpush1.msra.mxu0 %v370
    %414 = vmatprep.subr.mxu0 0.0
    %415 = vmatpush1.msra.mxu0 %v371
    %416 = vmatprep.subr.mxu0 0.0
    %417 = vmatpush1.msra.mxu0 %v372
    %418 = vmatprep.subr.mxu0 0.0
    %419 = vmatpush1.msra.mxu0 %v373
    %420 = vmatprep.subr.mxu0 0.0
    %421 = vmatpush1.msra.mxu0 %v374
    %422 = vmatprep.subr.mxu0 0.0
    %423 = vmatpush1.msra.mxu0 %v375
    %424 = vmatprep.subr.mxu0 0.0
    %425 = vmatpush1.msra.mxu0 0.0
    %426 = vmatprep.subr.mxu0 0.0
    %427 = vmatpush1.msra.mxu0 0.0
    %428 = vmatprep.subr.mxu0 0.0
    %429 = vmatpush1.msra.mxu0 0.0
    %430 = vmatprep.subr.mxu0 0.0
    %431 = vmatpush1.msra.mxu0 0.0
    %432 = vmatprep.subr.mxu0 0.0
    %433 = vmatpush1.msra.mxu0 0.0
    %434 = vmatprep.subr.mxu0 0.0
    %435 = vmatpush1.msra.mxu0 0.0
    %436 = vmatprep.subr.mxu0 0.0
    %437 = vmatpush1.msra.mxu0 0.0
    %438 = vmatprep.subr.mxu0 0.0
    %439 = vmatpush1.msra.mxu0 0.0
    %440 = vmatprep.subr.mxu0 0.0
    %441 = vmatpush1.msra.mxu0 0.0
    %442 = vmatprep.subr.mxu0 0.0
    %443 = vmatpush1.msra.mxu0 0.0
    %444 = vmatprep.subr.mxu0 0.0
    %445 = vmatpush1.msra.mxu0 0.0
    %446 = vmatprep.subr.mxu0 0.0
    %447 = vmatpush1.msra.mxu0 0.0
    %448 = vmatprep.subr.mxu0 0.0
    %449 = vmatpush1.msra.mxu0 0.0
    %450 = vmatprep.subr.mxu0 0.0
    %451 = vmatpush1.msra.mxu0 0.0
    %452 = vmatprep.subr.mxu0 0.0
    %453 = vmatpush1.msra.mxu0 0.0
    %454 = vmatprep.subr.mxu0 0.0
    %455 = vmatpush1.msra.mxu0 0.0
    %456 = vmatprep.mubr.f32.mxu0 0.0
    %457 = vmatmul.mubr.f32.gmra.mrb[0].mxu0 %v283
    %v458 = vpop.f32.mrb[0].mxu0
    %v459 = vadd.f32 %v357, %v458
    %v460 = vpop.f32.mrb[0].mxu0
    %461 = vdwg.mxu0
    %v462 = vlaneseq
    %v463 = vshrl.u32 %v462, 7
    %v464 = vsub.s32 2, %v463
    %v465 = vrot.slane %v106, %v464
    %v466 = vadd.f32 %v459, %v465
    %v467 = vlaneseq
    %v468 = vshrl.u32 %v467, 7
    %v469 = vsub.s32 3, %v468
    %v470 = vrot.slane %v106, %v469
    %471 = vmatprep.subr.mxu0 0.0
    %472 = vmatpush1.msra.mxu0 %v376
    %473 = vmatprep.subr.mxu0 0.0
    %474 = vmatpush1.msra.mxu0 %v377
    %475 = vmatprep.subr.mxu0 0.0
    %476 = vmatpush1.msra.mxu0 %v378
    %477 = vmatprep.subr.mxu0 0.0
    %478 = vmatpush1.msra.mxu0 %v379
    %479 = vmatprep.subr.mxu0 0.0
    %480 = vmatpush1.msra.mxu0 %v380
    %481 = vmatprep.subr.mxu0 0.0
    %482 = vmatpush1.msra.mxu0 %v381
    %483 = vmatprep.subr.mxu0 0.0
    %484 = vmatpush1.msra.mxu0 %v382
    %485 = vmatprep.subr.mxu0 0.0
    %486 = vmatpush1.msra.mxu0 %v383
    %487 = vmatprep.subr.mxu0 0.0
    %488 = vmatpush1.msra.mxu0 %v384
    %489 = vmatprep.subr.mxu0 0.0
    %490 = vmatpush1.msra.mxu0 %v385
    %491 = vmatprep.subr.mxu0 0.0
    %492 = vmatpush1.msra.mxu0 %v386
    %493 = vmatprep.subr.mxu0 0.0
    %494 = vmatpush1.msra.mxu0 %v387
    %495 = vmatprep.subr.mxu0 0.0
    %496 = vmatpush1.msra.mxu0 %v388
    %497 = vmatprep.subr.mxu0 0.0
    %498 = vmatpush1.msra.mxu0 %v389
    %499 = vmatprep.subr.mxu0 0.0
    %500 = vmatpush1.msra.mxu0 %v390
    %501 = vmatprep.subr.mxu0 0.0
    %502 = vmatpush1.msra.mxu0 %v391
    %503 = vmatprep.subr.mxu0 0.0
    %504 = vmatpush1.msra.mxu0 0.0
    %505 = vmatprep.subr.mxu0 0.0
    %506 = vmatpush1.msra.mxu0 0.0
    %507 = vmatprep.subr.mxu0 0.0
    %508 = vmatpush1.msra.mxu0 0.0
    %509 = vmatprep.subr.mxu0 0.0
    %510 = vmatpush1.msra.mxu0 0.0
    %511 = vmatprep.subr.mxu0 0.0
    %512 = vmatpush1.msra.mxu0 0.0
    %513 = vmatprep.subr.mxu0 0.0
    %514 = vmatpush1.msra.mxu0 0.0
    %515 = vmatprep.subr.mxu0 0.0
    %516 = vmatpush1.msra.mxu0 0.0
    %517 = vmatprep.subr.mxu0 0.0
    %518 = vmatpush1.msra.mxu0 0.0
    %519 = vmatprep.subr.mxu0 0.0
    %520 = vmatpush1.msra.mxu0 0.0
    %521 = vmatprep.subr.mxu0 0.0
    %522 = vmatpush1.msra.mxu0 0.0
    %523 = vmatprep.subr.mxu0 0.0
    %524 = vmatpush1.msra.mxu0 0.0
    %525 = vmatprep.subr.mxu0 0.0
    %526 = vmatpush1.msra.mxu0 0.0
    %527 = vmatprep.subr.mxu0 0.0
    %528 = vmatpush1.msra.mxu0 0.0
    %529 = vmatprep.subr.mxu0 0.0
    %530 = vmatpush1.msra.mxu0 0.0
    %531 = vmatprep.subr.mxu0 0.0
    %532 = vmatpush1.msra.mxu0 0.0
    %533 = vmatprep.subr.mxu0 0.0
    %534 = vmatpush1.msra.mxu0 0.0
    %535 = vmatprep.mubr.f32.mxu0 0.0
    %536 = vmatmul.mubr.f32.gmra.mrb[0].mxu0 %v466
    %v537 = vpop.f32.mrb[0].mxu0
    %v538 = vadd.f32 %v470, %v537
    %v539 = vpop.f32.mrb[0].mxu0
    %540 = vdwg.mxu0
    %v541 = vmul.f32 %v538, 0.2
    %v542 = vmax.f32 %v538, %v541
    %v543 = vadd.f32 %v466, %v542
    %544 = vst [vmem:[#allocation13] sm:$0xff] %v543
    // Predicated region
    $region58: #{tpu_custom_call.1} parent=1 // pred_check
      _
    $region59: #{tpu_custom_call.1} parent=1 // pred_check_branch
      %546 = sbr.rel (0) target = $region61
    $region60: #{tpu_custom_call.1} parent=1 // pred_region
      %s548 = ssub.s32 128, 128
      %549 = vsyncadd [#allocation4], %s548
      %s551 = sshll.u32 [#allocation13], 4
      %s552 = int_to_ptr.vmem [resolvable:$true] %s551
      %554 = dma.vmem_to_hbm [thread:$0]  %s552, 128, %s8, [#allocation4]
    $region61: #{tpu_custom_call.1} parent=1 // pred_fallthru
      _
    // Predicated region
    $region62: #{tpu_custom_call.1} parent=1 // pred_check
      _
    $region63: #{tpu_custom_call.1} parent=1 // pred_check_branch
      %556 = sbr.rel (0) target = $region65
    $region64: #{tpu_custom_call.1} parent=1 // pred_region
      %557 = dma.done [#allocation4], 128
    $region65: #{tpu_custom_call.1} parent=1 // pred_fallthru
      _
    %558 = vsyncpa [#allocation3], 1
    %559 = vsyncpa [#allocation6], 1
    %560 = vsyncpa [#allocation9], 1
    %561 = vsyncpa [#allocation12], 1
    %562 = vsyncpa [#allocation4], 1

</llo_original>
